<compile_context>
chip_gen: v7x
topology: tpu7x:2x2x1
jax: 0.10.0
libtpu: 0.0.40
codegen_flags: <defaults>
</compile_context>

<pallas_src>
import jax
import jax.numpy as jnp
import numpy as np
from jax.experimental import pallas as pl
from jax.experimental.pallas import tpu as pltpu

# --- KAN config fixed by the module __init__ ---
GRID_NUM = 3             # grid=3
K = 3                    # k=3
GRID_RANGE = (-1.0, 1.0)
NUM_BASIS = GRID_NUM + K     # 6 B-spline coefficients per edge
NUM_FEATS = NUM_BASIS + 1    # SiLU base + 6 spline bases


def _extended_knots():
    # pykan extend_grid: uniform knots over grid_range, extended by k points each side.
    h = (GRID_RANGE[1] - GRID_RANGE[0]) / GRID_NUM
    return [GRID_RANGE[0] + (j - K) * h for j in range(GRID_NUM + 2 * K + 1)]  # 10 knots


_KNOTS = _extended_knots()


def _bspline_basis(x):
    """Cox-de Boor recursion on the static extended knot vector (matches pykan B_batch), f32 math.

    Degree-0 indicators come from 10 monotone comparisons (B0_j = step_j - step_{j+1}),
    and all knot-difference divisions are folded into trace-time reciprocal constants so the
    per-element work stays on the 4-wide VALU instead of the single EUP slot.
    """
    one = jnp.float32(1.0)
    zero = jnp.float32(0.0)
    ge = [jnp.where(x >= kn, one, zero) for kn in _KNOTS]           # 10 comparisons
    B = [ge[j] - ge[j + 1] for j in range(len(_KNOTS) - 1)]         # 9 degree-0 indicators
    for deg in range(1, K + 1):
        B = [(x - _KNOTS[j]) * (1.0 / (_KNOTS[j + deg] - _KNOTS[j])) * B[j]
             + (_KNOTS[j + deg + 1] - x) * (1.0 / (_KNOTS[j + deg + 1] - _KNOTS[j + 1])) * B[j + 1]
             for j in range(len(B) - 1)]
    return B  # list of NUM_BASIS arrays, same shape as x


def kan_kernel(x_ref, w_ref, o_ref, feats_ref):
    # x_ref:     (din, tile_n)            f32   -- lanes = samples (dense)
    # w_ref:     (tile_dout, NUM_FEATS*din) bf16 -- pre-folded, pre-transposed weights
    # o_ref:     (tile_dout, tile_n)      f32   -- lane-dense output block
    # feats_ref: (NUM_FEATS*din, tile_n)  bf16  -- VMEM scratch, persists across dout tiles
    din = x_ref.shape[0]

    # The basis/SiLU work depends only on the row tile; compute it once per row tile
    # (dout grid axis is innermost and marked "arbitrary") and reuse across dout tiles.
    @pl.when(pl.program_id(1) == 0)
    def _():
        x = x_ref[...]                                              # f32
        feats_ref[pl.ds(0, din), :] = (x * jax.nn.sigmoid(x)).astype(jnp.bfloat16)   # SiLU base
        basis = _bspline_basis(x)                                   # 6 x (din, tile_n) f32
        for c in range(NUM_BASIS):
            feats_ref[pl.ds((c + 1) * din, din), :] = basis[c].astype(jnp.bfloat16)

    # Single MXU matmul, f32 accumulation; output lanes = tile_n (full-lane stores).
    o_ref[...] = jnp.dot(w_ref[...], feats_ref[...], preferred_element_type=jnp.float32)


def _round_up(a, b):
    return ((a + b - 1) // b) * b


def kan_original_forward(x, scale_base, scale_sp, coef, *, tile_n=1024, tile_dout=512):
    """x: (batch, seq, din); scale_base/scale_sp: (dout, din); coef: (dout, din, NUM_BASIS)."""
    B, S, din = x.shape
    dout = scale_base.shape[0]
    N = B * S

    # Row tiling: big tiles amortize per-grid-step overhead, but never bigger than the padded N.
    tile_n = min(tile_n, _round_up(max(N, 1), 128))
    n_tiles = pl.cdiv(N, tile_n)
    N_pad = n_tiles * tile_n

    # dout tiling (bounds weight/out VMEM on v7x's smaller VMEM for large layers).
    tile_dout = min(tile_dout, _round_up(dout, 128))
    dout_pad = _round_up(dout, tile_dout)
    d_tiles = dout_pad // tile_dout

    # Transposed activations: (din, N_pad) so the kernel's lane axis is the sample axis.
    x_t = x.reshape(N, din).astype(jnp.float32).T
    if N_pad != N:
        x_t = jnp.pad(x_t, ((0, 0), (0, N_pad - N)))   # padded samples sliced off after the call

    # Fold per-edge scales into matmul weights, transposed for the kernel:
    #   W[o, f*din + i] = scale_base[o,i]                 for f == 0
    #                     scale_sp[o,i] * coef[o,i,f-1]   for f >= 1
    w = jnp.concatenate(
        [scale_base[:, None, :].astype(jnp.float32),
         (scale_sp[:, None, :] * jnp.transpose(coef, (0, 2, 1))).astype(jnp.float32)],
        axis=1).reshape(dout, NUM_FEATS * din)
    if dout_pad != dout:
        w = jnp.pad(w, ((0, dout_pad - dout), (0, 0)))   # zero rows -> zero padded outputs
    w = w.astype(jnp.bfloat16)                           # bf16 MXU operands

    Fdin = NUM_FEATS * din

    out_t = pl.pallas_call(
        kan_kernel,
        out_shape=jax.ShapeDtypeStruct((dout_pad, N_pad), jnp.float32),
        grid_spec=pltpu.PrefetchScalarGridSpec(
            num_scalar_prefetch=0,
            grid=(n_tiles, d_tiles),
            in_specs=[
                # x block constant across the dout axis -> DMA'd once per row tile.
                pl.BlockSpec((din, tile_n), lambda i, j: (0, i)),
                # weight block depends only on the dout tile (constant per row tile when d_tiles==1).
                pl.BlockSpec((tile_dout, Fdin), lambda i, j: (j, 0)),
            ],
            out_specs=pl.BlockSpec((tile_dout, tile_n), lambda i, j: (j, i)),
            scratch_shapes=[pltpu.VMEM((Fdin, tile_n), jnp.bfloat16)],
        ),
        compiler_params=pltpu.CompilerParams(
            dimension_semantics=("parallel", "arbitrary")),
    )(x_t, w)

    return out_t[:dout, :N].T.reshape(B, S, dout)


def kan_reference(x, scale_base, scale_sp, coef):
    """Pure-JAX f32 reference of the same forward (for correctness check)."""
    B, S, din = x.shape
    x2 = x.reshape(-1, din).astype(jnp.float32)
    base = x2 * jax.nn.sigmoid(x2)
    basis = jnp.stack(_bspline_basis(x2), axis=-1)                  # (N, din, 6)
    spline = jnp.einsum('nic,oic->noi', basis, coef)                # (N, dout, din)
    y = scale_base[None] * base[:, None, :] + scale_sp[None] * spline
    return y.sum(-1).reshape(B, S, -1)


if __name__ == "__main__":
    # Small shapes consistent with the module forward: x of shape (batch, seq, in_features).
    batch, seq = 2, 8
    in_features, out_features = 32, 32

    key = jax.random.PRNGKey(0)
    k_x, k_sb, k_coef = jax.random.split(key, 3)

    x = jax.random.normal(k_x, (batch, seq, in_features), jnp.float32)

    # Deterministic synthetic parameter init (shapes as in pykan KANLayer):
    #   scale_base ~ 1/sqrt(din) + noise_scale_base * U(-1,1)   (sb_trainable)
    #   scale_sp   = 1                                           (sp_trainable)
    #   coef       ~ small noise (stands in for curve2coef fit of noise_scale noise)
    scale_base = (1.0 / jnp.sqrt(jnp.float32(in_features))
                  + (jax.random.uniform(k_sb, (out_features, in_features)) * 2.0 - 1.0) * 0.1)
    scale_sp = jnp.ones((out_features, in_features), jnp.float32)
    coef = jax.random.normal(k_coef, (out_features, in_features, NUM_BASIS), jnp.float32) * (0.1 / GRID_NUM)
    # TODO(synk): the symbolic_fun branch and bias are zero at init (mask/bias zeroed) and thus omitted.

    out = kan_original_forward(x, scale_base, scale_sp, coef)
    jax.block_until_ready(out)

    ref = kan_reference(x, scale_base, scale_sp, coef)
    assert out.shape == (batch, seq, out_features)
    # Tolerance accounts for bf16 matmul operands (f32 accumulate); real basis/weight bugs would be >>1e-1.
    np.testing.assert_allclose(np.asarray(out), np.asarray(ref), rtol=3e-2, atol=5e-2)

    print("KERNEL_OK")
</pallas_src>

<mosaic_0001>
module attributes {stable_mosaic.version = 11 : i64} {
  func.func @kan_kernel(%arg0: i32, %arg1: i32, %arg2: memref<32x128xf32, #tpu.memory_space<vmem>>, %arg3: memref<128x224xbf16, #tpu.memory_space<vmem>>, %arg4: memref<128x128xf32, #tpu.memory_space<vmem>>, %arg5: memref<224x128xbf16, #tpu.memory_space<vmem>>) attributes {dimension_semantics = [#tpu.dimension_semantics<parallel>, #tpu.dimension_semantics<arbitrary>], iteration_bounds = array<i64: 1, 1>, scalar_prefetch = 0 : i64, scratch_operands = 1 : i64, tpu.core_type = #tpu.core_type<tc>, window_params = [{transform_indices = @transform_0, window_bounds = array<i64: 32, 128>}, {transform_indices = @transform_1, window_bounds = array<i64: 128, 224>}, {transform_indices = @transform_2, window_bounds = array<i64: 128, 128>}]} {
    %c0_i32 = arith.constant 0 : i32
    %0 = arith.cmpi eq, %arg1, %c0_i32 : i32
    %1 = arith.extui %0 : i1 to i32
    %c0_i32_0 = arith.constant 0 : i32
    %2 = arith.cmpi ne, %1, %c0_i32_0 : i32
    scf.if %2 {
      %c0_6 = arith.constant 0 : index
      %c0_7 = arith.constant 0 : index
      %7 = vector.load %arg2[%c0_6, %c0_7] : memref<32x128xf32, #tpu.memory_space<vmem>>, vector<32x128xf32>
      %8 = arith.negf %7 : vector<32x128xf32>
      %9 = math.exp %8 : vector<32x128xf32>
      %cst_8 = arith.constant 1.000000e+00 : f32
      %10 = vector.broadcast %cst_8 : f32 to vector<32x128xf32>
      %11 = arith.addf %10, %9 : vector<32x128xf32>
      %12 = arith.divf %10, %11 : vector<32x128xf32>
      %13 = arith.mulf %7, %12 : vector<32x128xf32>
      %14 = arith.truncf %13 : vector<32x128xf32> to vector<32x128xbf16>
      %c0_9 = arith.constant 0 : index
      %c0_10 = arith.constant 0 : index
      %15 = vector.load %arg5[%c0_9, %c0_10] : memref<224x128xbf16, #tpu.memory_space<vmem>>, vector<32x128xbf16>
      tpu.vector_store %arg5[%c0_9, %c0_10], %14 {strides = array<i32>} : memref<224x128xbf16, #tpu.memory_space<vmem>>, vector<32x128xbf16>,
      %cst_11 = arith.constant -3.000000e+00 : f32
      %16 = vector.broadcast %cst_11 : f32 to vector<32x128xf32>
      %17 = arith.cmpf oge, %7, %16 : vector<32x128xf32>
      %cst_12 = arith.constant 1.000000e+00 : f32
      %cst_13 = arith.constant 0.000000e+00 : f32
      %18 = vector.broadcast %cst_12 : f32 to vector<32x128xf32>
      %19 = vector.broadcast %cst_13 : f32 to vector<32x128xf32>
      %20 = arith.select %17, %18, %19 : vector<32x128xi1>, vector<32x128xf32>
      %cst_14 = arith.constant -2.33333325 : f32
      %21 = vector.broadcast %cst_14 : f32 to vector<32x128xf32>
      %22 = arith.cmpf oge, %7, %21 : vector<32x128xf32>
      %cst_15 = arith.constant 1.000000e+00 : f32
      %cst_16 = arith.constant 0.000000e+00 : f32
      %23 = vector.broadcast %cst_15 : f32 to vector<32x128xf32>
      %24 = vector.broadcast %cst_16 : f32 to vector<32x128xf32>
      %25 = arith.select %22, %23, %24 : vector<32x128xi1>, vector<32x128xf32>
      %cst_17 = arith.constant -1.66666663 : f32
      %26 = vector.broadcast %cst_17 : f32 to vector<32x128xf32>
      %27 = arith.cmpf oge, %7, %26 : vector<32x128xf32>
      %cst_18 = arith.constant 1.000000e+00 : f32
      %cst_19 = arith.constant 0.000000e+00 : f32
      %28 = vector.broadcast %cst_18 : f32 to vector<32x128xf32>
      %29 = vector.broadcast %cst_19 : f32 to vector<32x128xf32>
      %30 = arith.select %27, %28, %29 : vector<32x128xi1>, vector<32x128xf32>
      %cst_20 = arith.constant -1.000000e+00 : f32
      %31 = vector.broadcast %cst_20 : f32 to vector<32x128xf32>
      %32 = arith.cmpf oge, %7, %31 : vector<32x128xf32>
      %cst_21 = arith.constant 1.000000e+00 : f32
      %cst_22 = arith.constant 0.000000e+00 : f32
      %33 = vector.broadcast %cst_21 : f32 to vector<32x128xf32>
      %34 = vector.broadcast %cst_22 : f32 to vector<32x128xf32>
      %35 = arith.select %32, %33, %34 : vector<32x128xi1>, vector<32x128xf32>
      %cst_23 = arith.constant -0.333333343 : f32
      %36 = vector.broadcast %cst_23 : f32 to vector<32x128xf32>
      %37 = arith.cmpf oge, %7, %36 : vector<32x128xf32>
      %cst_24 = arith.constant 1.000000e+00 : f32
      %cst_25 = arith.constant 0.000000e+00 : f32
      %38 = vector.broadcast %cst_24 : f32 to vector<32x128xf32>
      %39 = vector.broadcast %cst_25 : f32 to vector<32x128xf32>
      %40 = arith.select %37, %38, %39 : vector<32x128xi1>, vector<32x128xf32>
      %cst_26 = arith.constant 0.333333343 : f32
      %41 = vector.broadcast %cst_26 : f32 to vector<32x128xf32>
      %42 = arith.cmpf oge, %7, %41 : vector<32x128xf32>
      %cst_27 = arith.constant 1.000000e+00 : f32
      %cst_28 = arith.constant 0.000000e+00 : f32
      %43 = vector.broadcast %cst_27 : f32 to vector<32x128xf32>
      %44 = vector.broadcast %cst_28 : f32 to vector<32x128xf32>
      %45 = arith.select %42, %43, %44 : vector<32x128xi1>, vector<32x128xf32>
      %cst_29 = arith.constant 1.000000e+00 : f32
      %46 = vector.broadcast %cst_29 : f32 to vector<32x128xf32>
      %47 = arith.cmpf oge, %7, %46 : vector<32x128xf32>
      %cst_30 = arith.constant 1.000000e+00 : f32
      %cst_31 = arith.constant 0.000000e+00 : f32
      %48 = vector.broadcast %cst_30 : f32 to vector<32x128xf32>
      %49 = vector.broadcast %cst_31 : f32 to vector<32x128xf32>
      %50 = arith.select %47, %48, %49 : vector<32x128xi1>, vector<32x128xf32>
      %cst_32 = arith.constant 1.66666663 : f32
      %51 = vector.broadcast %cst_32 : f32 to vector<32x128xf32>
      %52 = arith.cmpf oge, %7, %51 : vector<32x128xf32>
      %cst_33 = arith.constant 1.000000e+00 : f32
      %cst_34 = arith.constant 0.000000e+00 : f32
      %53 = vector.broadcast %cst_33 : f32 to vector<32x128xf32>
      %54 = vector.broadcast %cst_34 : f32 to vector<32x128xf32>
      %55 = arith.select %52, %53, %54 : vector<32x128xi1>, vector<32x128xf32>
      %cst_35 = arith.constant 2.33333325 : f32
      %56 = vector.broadcast %cst_35 : f32 to vector<32x128xf32>
      %57 = arith.cmpf oge, %7, %56 : vector<32x128xf32>
      %cst_36 = arith.constant 1.000000e+00 : f32
      %cst_37 = arith.constant 0.000000e+00 : f32
      %58 = vector.broadcast %cst_36 : f32 to vector<32x128xf32>
      %59 = vector.broadcast %cst_37 : f32 to vector<32x128xf32>
      %60 = arith.select %57, %58, %59 : vector<32x128xi1>, vector<32x128xf32>
      %cst_38 = arith.constant 3.000000e+00 : f32
      %61 = vector.broadcast %cst_38 : f32 to vector<32x128xf32>
      %62 = arith.cmpf oge, %7, %61 : vector<32x128xf32>
      %cst_39 = arith.constant 1.000000e+00 : f32
      %cst_40 = arith.constant 0.000000e+00 : f32
      %63 = vector.broadcast %cst_39 : f32 to vector<32x128xf32>
      %64 = vector.broadcast %cst_40 : f32 to vector<32x128xf32>
      %65 = arith.select %62, %63, %64 : vector<32x128xi1>, vector<32x128xf32>
      %66 = arith.subf %20, %25 : vector<32x128xf32>
      %67 = arith.subf %25, %30 : vector<32x128xf32>
      %68 = arith.subf %30, %35 : vector<32x128xf32>
      %69 = arith.subf %35, %40 : vector<32x128xf32>
      %70 = arith.subf %40, %45 : vector<32x128xf32>
      %71 = arith.subf %45, %50 : vector<32x128xf32>
      %72 = arith.subf %50, %55 : vector<32x128xf32>
      %73 = arith.subf %55, %60 : vector<32x128xf32>
      %74 = arith.subf %60, %65 : vector<32x128xf32>
      %cst_41 = arith.constant -3.000000e+00 : f32
      %75 = vector.broadcast %cst_41 : f32 to vector<32x128xf32>
      %76 = arith.subf %7, %75 : vector<32x128xf32>
      %cst_42 = arith.constant 1.500000e+00 : f32
      %77 = vector.broadcast %cst_42 : f32 to vector<32x128xf32>
      %78 = arith.mulf %76, %77 : vector<32x128xf32>
      %79 = arith.mulf %78, %66 : vector<32x128xf32>
      %cst_43 = arith.constant -1.66666663 : f32
      %80 = vector.broadcast %cst_43 : f32 to vector<32x128xf32>
      %81 = arith.subf %80, %7 : vector<32x128xf32>
      %cst_44 = arith.constant 1.500000e+00 : f32
      %82 = vector.broadcast %cst_44 : f32 to vector<32x128xf32>
      %83 = arith.mulf %81, %82 : vector<32x128xf32>
      %84 = arith.mulf %83, %67 : vector<32x128xf32>
      %85 = arith.addf %79, %84 : vector<32x128xf32>
      %cst_45 = arith.constant -2.33333325 : f32
      %86 = vector.broadcast %cst_45 : f32 to vector<32x128xf32>
      %87 = arith.subf %7, %86 : vector<32x128xf32>
      %cst_46 = arith.constant 1.500000e+00 : f32
      %88 = vector.broadcast %cst_46 : f32 to vector<32x128xf32>
      %89 = arith.mulf %87, %88 : vector<32x128xf32>
      %90 = arith.mulf %89, %67 : vector<32x128xf32>
      %cst_47 = arith.constant -1.000000e+00 : f32
      %91 = vector.broadcast %cst_47 : f32 to vector<32x128xf32>
      %92 = arith.subf %91, %7 : vector<32x128xf32>
      %cst_48 = arith.constant 1.500000e+00 : f32
      %93 = vector.broadcast %cst_48 : f32 to vector<32x128xf32>
      %94 = arith.mulf %92, %93 : vector<32x128xf32>
      %95 = arith.mulf %94, %68 : vector<32x128xf32>
      %96 = arith.addf %90, %95 : vector<32x128xf32>
      %cst_49 = arith.constant -1.66666663 : f32
      %97 = vector.broadcast %cst_49 : f32 to vector<32x128xf32>
      %98 = arith.subf %7, %97 : vector<32x128xf32>
      %cst_50 = arith.constant 1.500000e+00 : f32
      %99 = vector.broadcast %cst_50 : f32 to vector<32x128xf32>
      %100 = arith.mulf %98, %99 : vector<32x128xf32>
      %101 = arith.mulf %100, %68 : vector<32x128xf32>
      %cst_51 = arith.constant -0.333333343 : f32
      %102 = vector.broadcast %cst_51 : f32 to vector<32x128xf32>
      %103 = arith.subf %102, %7 : vector<32x128xf32>
      %cst_52 = arith.constant 1.500000e+00 : f32
      %104 = vector.broadcast %cst_52 : f32 to vector<32x128xf32>
      %105 = arith.mulf %103, %104 : vector<32x128xf32>
      %106 = arith.mulf %105, %69 : vector<32x128xf32>
      %107 = arith.addf %101, %106 : vector<32x128xf32>
      %cst_53 = arith.constant -1.000000e+00 : f32
      %108 = vector.broadcast %cst_53 : f32 to vector<32x128xf32>
      %109 = arith.subf %7, %108 : vector<32x128xf32>
      %cst_54 = arith.constant 1.500000e+00 : f32
      %110 = vector.broadcast %cst_54 : f32 to vector<32x128xf32>
      %111 = arith.mulf %109, %110 : vector<32x128xf32>
      %112 = arith.mulf %111, %69 : vector<32x128xf32>
      %cst_55 = arith.constant 0.333333343 : f32
      %113 = vector.broadcast %cst_55 : f32 to vector<32x128xf32>
      %114 = arith.subf %113, %7 : vector<32x128xf32>
      %cst_56 = arith.constant 1.500000e+00 : f32
      %115 = vector.broadcast %cst_56 : f32 to vector<32x128xf32>
      %116 = arith.mulf %114, %115 : vector<32x128xf32>
      %117 = arith.mulf %116, %70 : vector<32x128xf32>
      %118 = arith.addf %112, %117 : vector<32x128xf32>
      %cst_57 = arith.constant -0.333333343 : f32
      %119 = vector.broadcast %cst_57 : f32 to vector<32x128xf32>
      %120 = arith.subf %7, %119 : vector<32x128xf32>
      %cst_58 = arith.constant 1.500000e+00 : f32
      %121 = vector.broadcast %cst_58 : f32 to vector<32x128xf32>
      %122 = arith.mulf %120, %121 : vector<32x128xf32>
      %123 = arith.mulf %122, %70 : vector<32x128xf32>
      %cst_59 = arith.constant 1.000000e+00 : f32
      %124 = vector.broadcast %cst_59 : f32 to vector<32x128xf32>
      %125 = arith.subf %124, %7 : vector<32x128xf32>
      %cst_60 = arith.constant 1.500000e+00 : f32
      %126 = vector.broadcast %cst_60 : f32 to vector<32x128xf32>
      %127 = arith.mulf %125, %126 : vector<32x128xf32>
      %128 = arith.mulf %127, %71 : vector<32x128xf32>
      %129 = arith.addf %123, %128 : vector<32x128xf32>
      %cst_61 = arith.constant 0.333333343 : f32
      %130 = vector.broadcast %cst_61 : f32 to vector<32x128xf32>
      %131 = arith.subf %7, %130 : vector<32x128xf32>
      %cst_62 = arith.constant 1.500000e+00 : f32
      %132 = vector.broadcast %cst_62 : f32 to vector<32x128xf32>
      %133 = arith.mulf %131, %132 : vector<32x128xf32>
      %134 = arith.mulf %133, %71 : vector<32x128xf32>
      %cst_63 = arith.constant 1.66666663 : f32
      %135 = vector.broadcast %cst_63 : f32 to vector<32x128xf32>
      %136 = arith.subf %135, %7 : vector<32x128xf32>
      %cst_64 = arith.constant 1.500000e+00 : f32
      %137 = vector.broadcast %cst_64 : f32 to vector<32x128xf32>
      %138 = arith.mulf %136, %137 : vector<32x128xf32>
      %139 = arith.mulf %138, %72 : vector<32x128xf32>
      %140 = arith.addf %134, %139 : vector<32x128xf32>
      %cst_65 = arith.constant 1.000000e+00 : f32
      %141 = vector.broadcast %cst_65 : f32 to vector<32x128xf32>
      %142 = arith.subf %7, %141 : vector<32x128xf32>
      %cst_66 = arith.constant 1.500000e+00 : f32
      %143 = vector.broadcast %cst_66 : f32 to vector<32x128xf32>
      %144 = arith.mulf %142, %143 : vector<32x128xf32>
      %145 = arith.mulf %144, %72 : vector<32x128xf32>
      %cst_67 = arith.constant 2.33333325 : f32
      %146 = vector.broadcast %cst_67 : f32 to vector<32x128xf32>
      %147 = arith.subf %146, %7 : vector<32x128xf32>
      %cst_68 = arith.constant 1.500000e+00 : f32
      %148 = vector.broadcast %cst_68 : f32 to vector<32x128xf32>
      %149 = arith.mulf %147, %148 : vector<32x128xf32>
      %150 = arith.mulf %149, %73 : vector<32x128xf32>
      %151 = arith.addf %145, %150 : vector<32x128xf32>
      %cst_69 = arith.constant 1.66666663 : f32
      %152 = vector.broadcast %cst_69 : f32 to vector<32x128xf32>
      %153 = arith.subf %7, %152 : vector<32x128xf32>
      %cst_70 = arith.constant 1.500000e+00 : f32
      %154 = vector.broadcast %cst_70 : f32 to vector<32x128xf32>
      %155 = arith.mulf %153, %154 : vector<32x128xf32>
      %156 = arith.mulf %155, %73 : vector<32x128xf32>
      %cst_71 = arith.constant 3.000000e+00 : f32
      %157 = vector.broadcast %cst_71 : f32 to vector<32x128xf32>
      %158 = arith.subf %157, %7 : vector<32x128xf32>
      %cst_72 = arith.constant 1.500000e+00 : f32
      %159 = vector.broadcast %cst_72 : f32 to vector<32x128xf32>
      %160 = arith.mulf %158, %159 : vector<32x128xf32>
      %161 = arith.mulf %160, %74 : vector<32x128xf32>
      %162 = arith.addf %156, %161 : vector<32x128xf32>
      %cst_73 = arith.constant -3.000000e+00 : f32
      %163 = vector.broadcast %cst_73 : f32 to vector<32x128xf32>
      %164 = arith.subf %7, %163 : vector<32x128xf32>
      %cst_74 = arith.constant 7.500000e-01 : f32
      %165 = vector.broadcast %cst_74 : f32 to vector<32x128xf32>
      %166 = arith.mulf %164, %165 : vector<32x128xf32>
      %167 = arith.mulf %166, %85 : vector<32x128xf32>
      %cst_75 = arith.constant -1.000000e+00 : f32
      %168 = vector.broadcast %cst_75 : f32 to vector<32x128xf32>
      %169 = arith.subf %168, %7 : vector<32x128xf32>
      %cst_76 = arith.constant 7.500000e-01 : f32
      %170 = vector.broadcast %cst_76 : f32 to vector<32x128xf32>
      %171 = arith.mulf %169, %170 : vector<32x128xf32>
      %172 = arith.mulf %171, %96 : vector<32x128xf32>
      %173 = arith.addf %167, %172 : vector<32x128xf32>
      %cst_77 = arith.constant -2.33333325 : f32
      %174 = vector.broadcast %cst_77 : f32 to vector<32x128xf32>
      %175 = arith.subf %7, %174 : vector<32x128xf32>
      %cst_78 = arith.constant 7.500000e-01 : f32
      %176 = vector.broadcast %cst_78 : f32 to vector<32x128xf32>
      %177 = arith.mulf %175, %176 : vector<32x128xf32>
      %178 = arith.mulf %177, %96 : vector<32x128xf32>
      %cst_79 = arith.constant -0.333333343 : f32
      %179 = vector.broadcast %cst_79 : f32 to vector<32x128xf32>
      %180 = arith.subf %179, %7 : vector<32x128xf32>
      %cst_80 = arith.constant 7.500000e-01 : f32
      %181 = vector.broadcast %cst_80 : f32 to vector<32x128xf32>
      %182 = arith.mulf %180, %181 : vector<32x128xf32>
      %183 = arith.mulf %182, %107 : vector<32x128xf32>
      %184 = arith.addf %178, %183 : vector<32x128xf32>
      %cst_81 = arith.constant -1.66666663 : f32
      %185 = vector.broadcast %cst_81 : f32 to vector<32x128xf32>
      %186 = arith.subf %7, %185 : vector<32x128xf32>
      %cst_82 = arith.constant 7.500000e-01 : f32
      %187 = vector.broadcast %cst_82 : f32 to vector<32x128xf32>
      %188 = arith.mulf %186, %187 : vector<32x128xf32>
      %189 = arith.mulf %188, %107 : vector<32x128xf32>
      %cst_83 = arith.constant 0.333333343 : f32
      %190 = vector.broadcast %cst_83 : f32 to vector<32x128xf32>
      %191 = arith.subf %190, %7 : vector<32x128xf32>
      %cst_84 = arith.constant 7.500000e-01 : f32
      %192 = vector.broadcast %cst_84 : f32 to vector<32x128xf32>
      %193 = arith.mulf %191, %192 : vector<32x128xf32>
      %194 = arith.mulf %193, %118 : vector<32x128xf32>
      %195 = arith.addf %189, %194 : vector<32x128xf32>
      %cst_85 = arith.constant -1.000000e+00 : f32
      %196 = vector.broadcast %cst_85 : f32 to vector<32x128xf32>
      %197 = arith.subf %7, %196 : vector<32x128xf32>
      %cst_86 = arith.constant 7.500000e-01 : f32
      %198 = vector.broadcast %cst_86 : f32 to vector<32x128xf32>
      %199 = arith.mulf %197, %198 : vector<32x128xf32>
      %200 = arith.mulf %199, %118 : vector<32x128xf32>
      %cst_87 = arith.constant 1.000000e+00 : f32
      %201 = vector.broadcast %cst_87 : f32 to vector<32x128xf32>
      %202 = arith.subf %201, %7 : vector<32x128xf32>
      %cst_88 = arith.constant 7.500000e-01 : f32
      %203 = vector.broadcast %cst_88 : f32 to vector<32x128xf32>
      %204 = arith.mulf %202, %203 : vector<32x128xf32>
      %205 = arith.mulf %204, %129 : vector<32x128xf32>
      %206 = arith.addf %200, %205 : vector<32x128xf32>
      %cst_89 = arith.constant -0.333333343 : f32
      %207 = vector.broadcast %cst_89 : f32 to vector<32x128xf32>
      %208 = arith.subf %7, %207 : vector<32x128xf32>
      %cst_90 = arith.constant 7.500000e-01 : f32
      %209 = vector.broadcast %cst_90 : f32 to vector<32x128xf32>
      %210 = arith.mulf %208, %209 : vector<32x128xf32>
      %211 = arith.mulf %210, %129 : vector<32x128xf32>
      %cst_91 = arith.constant 1.66666663 : f32
      %212 = vector.broadcast %cst_91 : f32 to vector<32x128xf32>
      %213 = arith.subf %212, %7 : vector<32x128xf32>
      %cst_92 = arith.constant 7.500000e-01 : f32
      %214 = vector.broadcast %cst_92 : f32 to vector<32x128xf32>
      %215 = arith.mulf %213, %214 : vector<32x128xf32>
      %216 = arith.mulf %215, %140 : vector<32x128xf32>
      %217 = arith.addf %211, %216 : vector<32x128xf32>
      %cst_93 = arith.constant 0.333333343 : f32
      %218 = vector.broadcast %cst_93 : f32 to vector<32x128xf32>
      %219 = arith.subf %7, %218 : vector<32x128xf32>
      %cst_94 = arith.constant 7.500000e-01 : f32
      %220 = vector.broadcast %cst_94 : f32 to vector<32x128xf32>
      %221 = arith.mulf %219, %220 : vector<32x128xf32>
      %222 = arith.mulf %221, %140 : vector<32x128xf32>
      %cst_95 = arith.constant 2.33333325 : f32
      %223 = vector.broadcast %cst_95 : f32 to vector<32x128xf32>
      %224 = arith.subf %223, %7 : vector<32x128xf32>
      %cst_96 = arith.constant 7.500000e-01 : f32
      %225 = vector.broadcast %cst_96 : f32 to vector<32x128xf32>
      %226 = arith.mulf %224, %225 : vector<32x128xf32>
      %227 = arith.mulf %226, %151 : vector<32x128xf32>
      %228 = arith.addf %222, %227 : vector<32x128xf32>
      %cst_97 = arith.constant 1.000000e+00 : f32
      %229 = vector.broadcast %cst_97 : f32 to vector<32x128xf32>
      %230 = arith.subf %7, %229 : vector<32x128xf32>
      %cst_98 = arith.constant 7.500000e-01 : f32
      %231 = vector.broadcast %cst_98 : f32 to vector<32x128xf32>
      %232 = arith.mulf %230, %231 : vector<32x128xf32>
      %233 = arith.mulf %232, %151 : vector<32x128xf32>
      %cst_99 = arith.constant 3.000000e+00 : f32
      %234 = vector.broadcast %cst_99 : f32 to vector<32x128xf32>
      %235 = arith.subf %234, %7 : vector<32x128xf32>
      %cst_100 = arith.constant 7.500000e-01 : f32
      %236 = vector.broadcast %cst_100 : f32 to vector<32x128xf32>
      %237 = arith.mulf %235, %236 : vector<32x128xf32>
      %238 = arith.mulf %237, %162 : vector<32x128xf32>
      %239 = arith.addf %233, %238 : vector<32x128xf32>
      %cst_101 = arith.constant -3.000000e+00 : f32
      %240 = vector.broadcast %cst_101 : f32 to vector<32x128xf32>
      %241 = arith.subf %7, %240 : vector<32x128xf32>
      %cst_102 = arith.constant 5.000000e-01 : f32
      %242 = vector.broadcast %cst_102 : f32 to vector<32x128xf32>
      %243 = arith.mulf %241, %242 : vector<32x128xf32>
      %244 = arith.mulf %243, %173 : vector<32x128xf32>
      %cst_103 = arith.constant -0.333333343 : f32
      %245 = vector.broadcast %cst_103 : f32 to vector<32x128xf32>
      %246 = arith.subf %245, %7 : vector<32x128xf32>
      %cst_104 = arith.constant 5.000000e-01 : f32
      %247 = vector.broadcast %cst_104 : f32 to vector<32x128xf32>
      %248 = arith.mulf %246, %247 : vector<32x128xf32>
      %249 = arith.mulf %248, %184 : vector<32x128xf32>
      %250 = arith.addf %244, %249 : vector<32x128xf32>
      %cst_105 = arith.constant -2.33333325 : f32
      %251 = vector.broadcast %cst_105 : f32 to vector<32x128xf32>
      %252 = arith.subf %7, %251 : vector<32x128xf32>
      %cst_106 = arith.constant 5.000000e-01 : f32
      %253 = vector.broadcast %cst_106 : f32 to vector<32x128xf32>
      %254 = arith.mulf %252, %253 : vector<32x128xf32>
      %255 = arith.mulf %254, %184 : vector<32x128xf32>
      %cst_107 = arith.constant 0.333333343 : f32
      %256 = vector.broadcast %cst_107 : f32 to vector<32x128xf32>
      %257 = arith.subf %256, %7 : vector<32x128xf32>
      %cst_108 = arith.constant 5.000000e-01 : f32
      %258 = vector.broadcast %cst_108 : f32 to vector<32x128xf32>
      %259 = arith.mulf %257, %258 : vector<32x128xf32>
      %260 = arith.mulf %259, %195 : vector<32x128xf32>
      %261 = arith.addf %255, %260 : vector<32x128xf32>
      %cst_109 = arith.constant -1.66666663 : f32
      %262 = vector.broadcast %cst_109 : f32 to vector<32x128xf32>
      %263 = arith.subf %7, %262 : vector<32x128xf32>
      %cst_110 = arith.constant 5.000000e-01 : f32
      %264 = vector.broadcast %cst_110 : f32 to vector<32x128xf32>
      %265 = arith.mulf %263, %264 : vector<32x128xf32>
      %266 = arith.mulf %265, %195 : vector<32x128xf32>
      %cst_111 = arith.constant 1.000000e+00 : f32
      %267 = vector.broadcast %cst_111 : f32 to vector<32x128xf32>
      %268 = arith.subf %267, %7 : vector<32x128xf32>
      %cst_112 = arith.constant 5.000000e-01 : f32
      %269 = vector.broadcast %cst_112 : f32 to vector<32x128xf32>
      %270 = arith.mulf %268, %269 : vector<32x128xf32>
      %271 = arith.mulf %270, %206 : vector<32x128xf32>
      %272 = arith.addf %266, %271 : vector<32x128xf32>
      %cst_113 = arith.constant -1.000000e+00 : f32
      %273 = vector.broadcast %cst_113 : f32 to vector<32x128xf32>
      %274 = arith.subf %7, %273 : vector<32x128xf32>
      %cst_114 = arith.constant 5.000000e-01 : f32
      %275 = vector.broadcast %cst_114 : f32 to vector<32x128xf32>
      %276 = arith.mulf %274, %275 : vector<32x128xf32>
      %277 = arith.mulf %276, %206 : vector<32x128xf32>
      %cst_115 = arith.constant 1.66666663 : f32
      %278 = vector.broadcast %cst_115 : f32 to vector<32x128xf32>
      %279 = arith.subf %278, %7 : vector<32x128xf32>
      %cst_116 = arith.constant 5.000000e-01 : f32
      %280 = vector.broadcast %cst_116 : f32 to vector<32x128xf32>
      %281 = arith.mulf %279, %280 : vector<32x128xf32>
      %282 = arith.mulf %281, %217 : vector<32x128xf32>
      %283 = arith.addf %277, %282 : vector<32x128xf32>
      %cst_117 = arith.constant -0.333333343 : f32
      %284 = vector.broadcast %cst_117 : f32 to vector<32x128xf32>
      %285 = arith.subf %7, %284 : vector<32x128xf32>
      %cst_118 = arith.constant 5.000000e-01 : f32
      %286 = vector.broadcast %cst_118 : f32 to vector<32x128xf32>
      %287 = arith.mulf %285, %286 : vector<32x128xf32>
      %288 = arith.mulf %287, %217 : vector<32x128xf32>
      %cst_119 = arith.constant 2.33333325 : f32
      %289 = vector.broadcast %cst_119 : f32 to vector<32x128xf32>
      %290 = arith.subf %289, %7 : vector<32x128xf32>
      %cst_120 = arith.constant 5.000000e-01 : f32
      %291 = vector.broadcast %cst_120 : f32 to vector<32x128xf32>
      %292 = arith.mulf %290, %291 : vector<32x128xf32>
      %293 = arith.mulf %292, %228 : vector<32x128xf32>
      %294 = arith.addf %288, %293 : vector<32x128xf32>
      %cst_121 = arith.constant 0.333333343 : f32
      %295 = vector.broadcast %cst_121 : f32 to vector<32x128xf32>
      %296 = arith.subf %7, %295 : vector<32x128xf32>
      %cst_122 = arith.constant 5.000000e-01 : f32
      %297 = vector.broadcast %cst_122 : f32 to vector<32x128xf32>
      %298 = arith.mulf %296, %297 : vector<32x128xf32>
      %299 = arith.mulf %298, %228 : vector<32x128xf32>
      %cst_123 = arith.constant 3.000000e+00 : f32
      %300 = vector.broadcast %cst_123 : f32 to vector<32x128xf32>
      %301 = arith.subf %300, %7 : vector<32x128xf32>
      %cst_124 = arith.constant 5.000000e-01 : f32
      %302 = vector.broadcast %cst_124 : f32 to vector<32x128xf32>
      %303 = arith.mulf %301, %302 : vector<32x128xf32>
      %304 = arith.mulf %303, %239 : vector<32x128xf32>
      %305 = arith.addf %299, %304 : vector<32x128xf32>
      %306 = arith.truncf %250 : vector<32x128xf32> to vector<32x128xbf16>
      %c32 = arith.constant 32 : index
      %c0_125 = arith.constant 0 : index
      %307 = vector.load %arg5[%c32, %c0_125] : memref<224x128xbf16, #tpu.memory_space<vmem>>, vector<32x128xbf16>
      tpu.vector_store %arg5[%c32, %c0_125], %306 {strides = array<i32>} : memref<224x128xbf16, #tpu.memory_space<vmem>>, vector<32x128xbf16>,
      %308 = arith.truncf %261 : vector<32x128xf32> to vector<32x128xbf16>
      %c64 = arith.constant 64 : index
      %c0_126 = arith.constant 0 : index
      %309 = vector.load %arg5[%c64, %c0_126] : memref<224x128xbf16, #tpu.memory_space<vmem>>, vector<32x128xbf16>
      tpu.vector_store %arg5[%c64, %c0_126], %308 {strides = array<i32>} : memref<224x128xbf16, #tpu.memory_space<vmem>>, vector<32x128xbf16>,
      %310 = arith.truncf %272 : vector<32x128xf32> to vector<32x128xbf16>
      %c96 = arith.constant 96 : index
      %c0_127 = arith.constant 0 : index
      %311 = vector.load %arg5[%c96, %c0_127] : memref<224x128xbf16, #tpu.memory_space<vmem>>, vector<32x128xbf16>
      tpu.vector_store %arg5[%c96, %c0_127], %310 {strides = array<i32>} : memref<224x128xbf16, #tpu.memory_space<vmem>>, vector<32x128xbf16>,
      %312 = arith.truncf %283 : vector<32x128xf32> to vector<32x128xbf16>
      %c128 = arith.constant 128 : index
      %c0_128 = arith.constant 0 : index
      %313 = vector.load %arg5[%c128, %c0_128] : memref<224x128xbf16, #tpu.memory_space<vmem>>, vector<32x128xbf16>
      tpu.vector_store %arg5[%c128, %c0_128], %312 {strides = array<i32>} : memref<224x128xbf16, #tpu.memory_space<vmem>>, vector<32x128xbf16>,
      %314 = arith.truncf %294 : vector<32x128xf32> to vector<32x128xbf16>
      %c160 = arith.constant 160 : index
      %c0_129 = arith.constant 0 : index
      %315 = vector.load %arg5[%c160, %c0_129] : memref<224x128xbf16, #tpu.memory_space<vmem>>, vector<32x128xbf16>
      tpu.vector_store %arg5[%c160, %c0_129], %314 {strides = array<i32>} : memref<224x128xbf16, #tpu.memory_space<vmem>>, vector<32x128xbf16>,
      %316 = arith.truncf %305 : vector<32x128xf32> to vector<32x128xbf16>
      %c192 = arith.constant 192 : index
      %c0_130 = arith.constant 0 : index
      %317 = vector.load %arg5[%c192, %c0_130] : memref<224x128xbf16, #tpu.memory_space<vmem>>, vector<32x128xbf16>
      tpu.vector_store %arg5[%c192, %c0_130], %316 {strides = array<i32>} : memref<224x128xbf16, #tpu.memory_space<vmem>>, vector<32x128xbf16>,
    } else {
    }
    %c0 = arith.constant 0 : index
    %c0_1 = arith.constant 0 : index
    %3 = vector.load %arg3[%c0, %c0_1] : memref<128x224xbf16, #tpu.memory_space<vmem>>, vector<128x224xbf16>
    %c0_2 = arith.constant 0 : index
    %c0_3 = arith.constant 0 : index
    %4 = vector.load %arg5[%c0_2, %c0_3] : memref<224x128xbf16, #tpu.memory_space<vmem>>, vector<224x128xbf16>
    %cst = arith.constant dense<0.000000e+00> : vector<128x128xf32>
    %5 = tpu.matmul %3, %4, %cst {dimension_numbers = #tpu.dot_dimension_numbers<[1], [0], [0], [1], [0, 0, 1, 1], [], []>} : vector<128x224xbf16>, vector<224x128xbf16>, vector<128x128xf32> -> vector<128x128xf32>
    %c0_4 = arith.constant 0 : index
    %c0_5 = arith.constant 0 : index
    %6 = vector.load %arg4[%c0_4, %c0_5] : memref<128x128xf32, #tpu.memory_space<vmem>>, vector<128x128xf32>
    tpu.vector_store %arg4[%c0_4, %c0_5], %5 {strides = array<i32>} : memref<128x128xf32, #tpu.memory_space<vmem>>, vector<128x128xf32>,
    return
  }
  func.func @transform_0(%arg0: i32, %arg1: i32) -> (i32, i32) {
    %c0_i32 = arith.constant 0 : i32
    %c0_i32_0 = arith.constant 0 : i32
    return %c0_i32, %arg0 : i32, i32
  }
  func.func @transform_1(%arg0: i32, %arg1: i32) -> (i32, i32) {
    %c0_i32 = arith.constant 0 : i32
    %c0_i32_0 = arith.constant 0 : i32
    return %arg1, %c0_i32 : i32, i32
  }
  func.func @transform_2(%arg0: i32, %arg1: i32) -> (i32, i32) {
    %c0_i32 = arith.constant 0 : i32
    return %arg1, %arg0 : i32, i32
  }
}

</mosaic_0001>

<llo_original>
// kernel: tpu_custom_call.1
$region0: #{tpu_custom_call.1}
  #allocation0 [shape = 'u32[]', space=smem, size = 0x4, offset = 0x4, fixed_abs, tag = 'smem constant byte address 0x4 - core index']
  #allocation1 [shape = 'u32[144,128]{1,0:T(1,128)}', space=vmem, size = 0x12000, scoped, tag = 'internal scratch']
  #allocation2 [shape = 'bf16[224,128]{1,0:T(16,128)(2,1)}', space=vmem, size = 0xe000, scoped, tag = 'scratch operand']
  %s0 = inlined_call_operand.vmem [shape: f32[32,128], index: 0, kind: input, shape index: {}]
  %s1 = inlined_call_operand.vmem [shape: bf16[128,224], index: 1, kind: input, shape index: {}]
  %s2 = inlined_call_operand.hbm [shape: f32[128,128], index: 2, kind: output, shape index: {}]
  %s3 = sld [smem:[#allocation0]]
  $region22: #{tpu_custom_call.1} parent=0
    _
  %s5 = ssub.s32 1, %s3
  %s6 = scalar_select 0, %s5, %s3
  $region1: #{tpu_custom_call.1} parent=0
    #allocation3 [shape = 'u8[65536]{0}', space=vmem, size = 0x10000, scoped, tag = 'output window, operand 0, single buffered']
    #allocation4 [shape = 's32[1]{0}', space=sflag, size = 0x4, scoped, tag = 'scoped memory for tpu_custom_call.1']
    %7 = vsyncpa [#allocation4], 0
    // Predicated region
    $region2: #{tpu_custom_call.1} parent=1 // pred_check
      _
    $region3: #{tpu_custom_call.1} parent=1 // pred_check_branch
      %9 = sbr.rel (0) target = $region5
    $region4: #{tpu_custom_call.1} parent=1 // pred_region
      _
    $region5: #{tpu_custom_call.1} parent=1 // pred_fallthru
      _
    // Predicated region
    $region6: #{tpu_custom_call.1} parent=1 // pred_check
      _
    $region7: #{tpu_custom_call.1} parent=1 // pred_check_branch
      %11 = sbr.rel (0) target = $region9
    $region8: #{tpu_custom_call.1} parent=1 // pred_region
      _
    $region9: #{tpu_custom_call.1} parent=1 // pred_fallthru
      _
    %p13 = scmp.eq.s32.totalorder 0, 0
    // Predicated region
    $region10: #{tpu_custom_call.1} parent=1 // pred_check
      %p14 = pneg %p13
    $region11: #{tpu_custom_call.1} parent=1 // pred_check_branch
      %16 = sbr.rel (%p14) target = $region13
    $region12: #{tpu_custom_call.1} parent=1 // pred_region
      %v17 = vld [vmem:[%s0] sm:$0xff]
      %v18 = vld [vmem:[%s0 + $0x8] sm:$0xff]
      %v19 = vld [vmem:[%s0 + $0x10] sm:$0xff]
      %v20 = vld [vmem:[%s0 + $0x18] sm:$0xff]
      %v21 = vxor.u32 %v17, 2147483648
      %v22 = vxor.u32 %v18, 2147483648
      %v23 = vxor.u32 %v19, 2147483648
      %v24 = vxor.u32 %v20, 2147483648
      %v25 = vmul.f32 %v21, 1.442695
      %v26 = vpow.pop %v25
      %v27 = vmul.f32 %v22, 1.442695
      %v28 = vpow.pop %v27
      %v29 = vmul.f32 %v23, 1.442695
      %v30 = vpow.pop %v29
      %v31 = vmul.f32 %v24, 1.442695
      %v32 = vpow.pop %v31
      %v33 = vadd.f32 %v26, 1.0
      %v34 = vadd.f32 %v28, 1.0
      %v35 = vadd.f32 %v30, 1.0
      %v36 = vadd.f32 %v32, 1.0
      %v37 = vrcp.pop %v33
      %v38 = vmul.f32 1.0, %v37
      %v39 = vrcp.pop %v34
      %v40 = vmul.f32 1.0, %v39
      %v41 = vrcp.pop %v35
      %v42 = vmul.f32 1.0, %v41
      %v43 = vrcp.pop %v36
      %v44 = vmul.f32 1.0, %v43
      %v45 = vmul.f32 %v17, %v38
      %v46 = vmul.f32 %v18, %v40
      %v47 = vmul.f32 %v19, %v42
      %v48 = vmul.f32 %v20, %v44
      %v49 = vpack.c.bf16 %v46, %v45
      %v50 = vpack.c.bf16 %v48, %v47
      %51 = vst [vmem:[#allocation2] sm:$0xff] %v49
      %52 = vst [vmem:[#allocation2 + $0x8] sm:$0xff] %v50
      %vm53 = vcmp.ge.f32.partialorder %v17, -3.0
      %vm54 = vcmp.ge.f32.partialorder %v18, -3.0
      %vm55 = vcmp.ge.f32.partialorder %v19, -3.0
      %vm56 = vcmp.ge.f32.partialorder %v20, -3.0
      %v57 = vsel %vm53, 1.0, 0.0
      %v58 = vsel %vm54, 1.0, 0.0
      %v59 = vsel %vm55, 1.0, 0.0
      %v60 = vsel %vm56, 1.0, 0.0
      %vm61 = vcmp.ge.f32.partialorder %v17, -2.3333333
      %vm62 = vcmp.ge.f32.partialorder %v18, -2.3333333
      %vm63 = vcmp.ge.f32.partialorder %v19, -2.3333333
      %vm64 = vcmp.ge.f32.partialorder %v20, -2.3333333
      %v65 = vsel %vm61, 1.0, 0.0
      %v66 = vsel %vm62, 1.0, 0.0
      %v67 = vsel %vm63, 1.0, 0.0
      %v68 = vsel %vm64, 1.0, 0.0
      %vm69 = vcmp.ge.f32.partialorder %v17, -1.6666666
      %vm70 = vcmp.ge.f32.partialorder %v18, -1.6666666
      %vm71 = vcmp.ge.f32.partialorder %v19, -1.6666666
      %vm72 = vcmp.ge.f32.partialorder %v20, -1.6666666
      %v73 = vsel %vm69, 1.0, 0.0
      %v74 = vsel %vm70, 1.0, 0.0
      %v75 = vsel %vm71, 1.0, 0.0
      %v76 = vsel %vm72, 1.0, 0.0
      %vm77 = vcmp.ge.f32.partialorder %v17, -1.0
      %vm78 = vcmp.ge.f32.partialorder %v18, -1.0
      %vm79 = vcmp.ge.f32.partialorder %v19, -1.0
      %vm80 = vcmp.ge.f32.partialorder %v20, -1.0
      %v81 = vsel %vm77, 1.0, 0.0
      %v82 = vsel %vm78, 1.0, 0.0
      %v83 = vsel %vm79, 1.0, 0.0
      %v84 = vsel %vm80, 1.0, 0.0
      %vm85 = vcmp.ge.f32.partialorder %v17, -0.33333334
      %vm86 = vcmp.ge.f32.partialorder %v18, -0.33333334
      %vm87 = vcmp.ge.f32.partialorder %v19, -0.33333334
      %vm88 = vcmp.ge.f32.partialorder %v20, -0.33333334
      %v89 = vsel %vm85, 1.0, 0.0
      %v90 = vsel %vm86, 1.0, 0.0
      %v91 = vsel %vm87, 1.0, 0.0
      %v92 = vsel %vm88, 1.0, 0.0
      %vm93 = vcmp.ge.f32.partialorder %v17, 0.33333334
      %vm94 = vcmp.ge.f32.partialorder %v18, 0.33333334
      %vm95 = vcmp.ge.f32.partialorder %v19, 0.33333334
      %vm96 = vcmp.ge.f32.partialorder %v20, 0.33333334
      %v97 = vsel %vm93, 1.0, 0.0
      %v98 = vsel %vm94, 1.0, 0.0
      %v99 = vsel %vm95, 1.0, 0.0
      %v100 = vsel %vm96, 1.0, 0.0
      %vm101 = vcmp.ge.f32.partialorder %v17, 1.0
      %vm102 = vcmp.ge.f32.partialorder %v18, 1.0
      %vm103 = vcmp.ge.f32.partialorder %v19, 1.0
      %vm104 = vcmp.ge.f32.partialorder %v20, 1.0
      %v105 = vsel %vm101, 1.0, 0.0
      %v106 = vsel %vm102, 1.0, 0.0
      %v107 = vsel %vm103, 1.0, 0.0
      %v108 = vsel %vm104, 1.0, 0.0
      %vm109 = vcmp.ge.f32.partialorder %v17, 1.6666666
      %vm110 = vcmp.ge.f32.partialorder %v18, 1.6666666
      %vm111 = vcmp.ge.f32.partialorder %v19, 1.6666666
      %vm112 = vcmp.ge.f32.partialorder %v20, 1.6666666
      %v113 = vsel %vm109, 1.0, 0.0
      %v114 = vsel %vm110, 1.0, 0.0
      %v115 = vsel %vm111, 1.0, 0.0
      %v116 = vsel %vm112, 1.0, 0.0
      %vm117 = vcmp.ge.f32.partialorder %v17, 2.3333333
      %vm118 = vcmp.ge.f32.partialorder %v18, 2.3333333
      %vm119 = vcmp.ge.f32.partialorder %v19, 2.3333333
      %vm120 = vcmp.ge.f32.partialorder %v20, 2.3333333
      %v121 = vsel %vm117, 1.0, 0.0
      %v122 = vsel %vm118, 1.0, 0.0
      %v123 = vsel %vm119, 1.0, 0.0
      %v124 = vsel %vm120, 1.0, 0.0
      %vm125 = vcmp.ge.f32.partialorder %v17, 3.0
      %vm126 = vcmp.ge.f32.partialorder %v18, 3.0
      %vm127 = vcmp.ge.f32.partialorder %v19, 3.0
      %vm128 = vcmp.ge.f32.partialorder %v20, 3.0
      %v129 = vsel %vm125, 1.0, 0.0
      %v130 = vsel %vm126, 1.0, 0.0
      %v131 = vsel %vm127, 1.0, 0.0
      %v132 = vsel %vm128, 1.0, 0.0
      %v133 = vsub.f32 %v57, %v65
      %v134 = vsub.f32 %v58, %v66
      %v135 = vsub.f32 %v59, %v67
      %v136 = vsub.f32 %v60, %v68
      %v137 = vsub.f32 %v65, %v73
      %v138 = vsub.f32 %v66, %v74
      %v139 = vsub.f32 %v67, %v75
      %v140 = vsub.f32 %v68, %v76
      %v141 = vsub.f32 %v73, %v81
      %v142 = vsub.f32 %v74, %v82
      %v143 = vsub.f32 %v75, %v83
      %v144 = vsub.f32 %v76, %v84
      %v145 = vsub.f32 %v81, %v89
      %v146 = vsub.f32 %v82, %v90
      %v147 = vsub.f32 %v83, %v91
      %v148 = vsub.f32 %v84, %v92
      %v149 = vsub.f32 %v89, %v97
      %v150 = vsub.f32 %v90, %v98
      %v151 = vsub.f32 %v91, %v99
      %v152 = vsub.f32 %v92, %v100
      %v153 = vsub.f32 %v97, %v105
      %v154 = vsub.f32 %v98, %v106
      %v155 = vsub.f32 %v99, %v107
      %v156 = vsub.f32 %v100, %v108
      %v157 = vsub.f32 %v105, %v113
      %v158 = vsub.f32 %v106, %v114
      %v159 = vsub.f32 %v107, %v115
      %v160 = vsub.f32 %v108, %v116
      %v161 = vsub.f32 %v113, %v121
      %v162 = vsub.f32 %v114, %v122
      %v163 = vsub.f32 %v115, %v123
      %v164 = vsub.f32 %v116, %v124
      %v165 = vsub.f32 %v121, %v129
      %v166 = vsub.f32 %v122, %v130
      %v167 = vsub.f32 %v123, %v131
      %v168 = vsub.f32 %v124, %v132
      %v169 = vsub.f32 %v17, -3.0
      %v170 = vsub.f32 %v18, -3.0
      %v171 = vsub.f32 %v19, -3.0
      %v172 = vsub.f32 %v20, -3.0
      %v173 = vmul.f32 %v169, 1.5
      %v174 = vmul.f32 %v170, 1.5
      %v175 = vmul.f32 %v171, 1.5
      %v176 = vmul.f32 %v172, 1.5
      %v177 = vmul.f32 %v173, %v133
      %v178 = vmul.f32 %v174, %v134
      %v179 = vmul.f32 %v175, %v135
      %v180 = vmul.f32 %v176, %v136
      %v181 = vsub.f32 -1.6666666, %v17
      %v182 = vsub.f32 -1.6666666, %v18
      %v183 = vsub.f32 -1.6666666, %v19
      %v184 = vsub.f32 -1.6666666, %v20
      %v185 = vmul.f32 %v181, 1.5
      %v186 = vmul.f32 %v182, 1.5
      %v187 = vmul.f32 %v183, 1.5
      %v188 = vmul.f32 %v184, 1.5
      %v189 = vmul.f32 %v185, %v137
      %v190 = vmul.f32 %v186, %v138
      %v191 = vmul.f32 %v187, %v139
      %v192 = vmul.f32 %v188, %v140
      %v193 = vadd.f32 %v177, %v189
      %v194 = vadd.f32 %v178, %v190
      %v195 = vadd.f32 %v179, %v191
      %v196 = vadd.f32 %v180, %v192
      %v197 = vsub.f32 %v17, -2.3333333
      %v198 = vsub.f32 %v18, -2.3333333
      %v199 = vsub.f32 %v19, -2.3333333
      %v200 = vsub.f32 %v20, -2.3333333
      %v201 = vmul.f32 %v197, 1.5
      %v202 = vmul.f32 %v198, 1.5
      %v203 = vmul.f32 %v199, 1.5
      %v204 = vmul.f32 %v200, 1.5
      %v205 = vmul.f32 %v201, %v137
      %v206 = vmul.f32 %v202, %v138
      %v207 = vmul.f32 %v203, %v139
      %v208 = vmul.f32 %v204, %v140
      %v209 = vsub.f32 -1.0, %v17
      %v210 = vsub.f32 -1.0, %v18
      %v211 = vsub.f32 -1.0, %v19
      %v212 = vsub.f32 -1.0, %v20
      %v213 = vmul.f32 %v209, 1.5
      %v214 = vmul.f32 %v210, 1.5
      %v215 = vmul.f32 %v211, 1.5
      %v216 = vmul.f32 %v212, 1.5
      %v217 = vmul.f32 %v213, %v141
      %v218 = vmul.f32 %v214, %v142
      %v219 = vmul.f32 %v215, %v143
      %v220 = vmul.f32 %v216, %v144
      %v221 = vadd.f32 %v205, %v217
      %v222 = vadd.f32 %v206, %v218
      %v223 = vadd.f32 %v207, %v219
      %v224 = vadd.f32 %v208, %v220
      %v225 = vsub.f32 %v17, -1.6666666
      %v226 = vsub.f32 %v18, -1.6666666
      %v227 = vsub.f32 %v19, -1.6666666
      %v228 = vsub.f32 %v20, -1.6666666
      %v229 = vmul.f32 %v225, 1.5
      %v230 = vmul.f32 %v226, 1.5
      %v231 = vmul.f32 %v227, 1.5
      %v232 = vmul.f32 %v228, 1.5
      %v233 = vmul.f32 %v229, %v141
      %v234 = vmul.f32 %v230, %v142
      %v235 = vmul.f32 %v231, %v143
      %v236 = vmul.f32 %v232, %v144
      %v237 = vsub.f32 -0.33333334, %v17
      %v238 = vsub.f32 -0.33333334, %v18
      %v239 = vsub.f32 -0.33333334, %v19
      %v240 = vsub.f32 -0.33333334, %v20
      %v241 = vmul.f32 %v237, 1.5
      %v242 = vmul.f32 %v238, 1.5
      %v243 = vmul.f32 %v239, 1.5
      %v244 = vmul.f32 %v240, 1.5
      %v245 = vmul.f32 %v241, %v145
      %v246 = vmul.f32 %v242, %v146
      %v247 = vmul.f32 %v243, %v147
      %v248 = vmul.f32 %v244, %v148
      %v249 = vadd.f32 %v233, %v245
      %v250 = vadd.f32 %v234, %v246
      %v251 = vadd.f32 %v235, %v247
      %v252 = vadd.f32 %v236, %v248
      %v253 = vsub.f32 %v17, -1.0
      %v254 = vsub.f32 %v18, -1.0
      %v255 = vsub.f32 %v19, -1.0
      %v256 = vsub.f32 %v20, -1.0
      %v257 = vmul.f32 %v253, 1.5
      %v258 = vmul.f32 %v254, 1.5
      %v259 = vmul.f32 %v255, 1.5
      %v260 = vmul.f32 %v256, 1.5
      %v261 = vmul.f32 %v257, %v145
      %v262 = vmul.f32 %v258, %v146
      %v263 = vmul.f32 %v259, %v147
      %v264 = vmul.f32 %v260, %v148
      %v265 = vsub.f32 0.33333334, %v17
      %v266 = vsub.f32 0.33333334, %v18
      %v267 = vsub.f32 0.33333334, %v19
      %v268 = vsub.f32 0.33333334, %v20
      %v269 = vmul.f32 %v265, 1.5
      %v270 = vmul.f32 %v266, 1.5
      %v271 = vmul.f32 %v267, 1.5
      %v272 = vmul.f32 %v268, 1.5
      %v273 = vmul.f32 %v269, %v149
      %v274 = vmul.f32 %v270, %v150
      %v275 = vmul.f32 %v271, %v151
      %v276 = vmul.f32 %v272, %v152
      %v277 = vadd.f32 %v261, %v273
      %v278 = vadd.f32 %v262, %v274
      %v279 = vadd.f32 %v263, %v275
      %v280 = vadd.f32 %v264, %v276
      %v281 = vsub.f32 %v17, -0.33333334
      %v282 = vsub.f32 %v18, -0.33333334
      %v283 = vsub.f32 %v19, -0.33333334
      %v284 = vsub.f32 %v20, -0.33333334
      %v285 = vmul.f32 %v281, 1.5
      %v286 = vmul.f32 %v282, 1.5
      %v287 = vmul.f32 %v283, 1.5
      %v288 = vmul.f32 %v284, 1.5
      %v289 = vmul.f32 %v285, %v149
      %v290 = vmul.f32 %v286, %v150
      %v291 = vmul.f32 %v287, %v151
      %v292 = vmul.f32 %v288, %v152
      %v293 = vsub.f32 1.0, %v17
      %v294 = vsub.f32 1.0, %v18
      %v295 = vsub.f32 1.0, %v19
      %v296 = vsub.f32 1.0, %v20
      %v297 = vmul.f32 %v293, 1.5
      %v298 = vmul.f32 %v294, 1.5
      %v299 = vmul.f32 %v295, 1.5
      %v300 = vmul.f32 %v296, 1.5
      %v301 = vmul.f32 %v297, %v153
      %v302 = vmul.f32 %v298, %v154
      %v303 = vmul.f32 %v299, %v155
      %v304 = vmul.f32 %v300, %v156
      %v305 = vadd.f32 %v289, %v301
      %v306 = vadd.f32 %v290, %v302
      %v307 = vadd.f32 %v291, %v303
      %v308 = vadd.f32 %v292, %v304
      %v309 = vsub.f32 %v17, 0.33333334
      %v310 = vsub.f32 %v18, 0.33333334
      %v311 = vsub.f32 %v19, 0.33333334
      %v312 = vsub.f32 %v20, 0.33333334
      %v313 = vmul.f32 %v309, 1.5
      %v314 = vmul.f32 %v310, 1.5
      %v315 = vmul.f32 %v311, 1.5
      %v316 = vmul.f32 %v312, 1.5
      %v317 = vmul.f32 %v313, %v153
      %v318 = vmul.f32 %v314, %v154
      %v319 = vmul.f32 %v315, %v155
      %v320 = vmul.f32 %v316, %v156
      %v321 = vsub.f32 1.6666666, %v17
      %v322 = vsub.f32 1.6666666, %v18
      %v323 = vsub.f32 1.6666666, %v19
      %v324 = vsub.f32 1.6666666, %v20
      %v325 = vmul.f32 %v321, 1.5
      %v326 = vmul.f32 %v322, 1.5
      %v327 = vmul.f32 %v323, 1.5
      %v328 = vmul.f32 %v324, 1.5
      %v329 = vmul.f32 %v325, %v157
      %v330 = vmul.f32 %v326, %v158
      %v331 = vmul.f32 %v327, %v159
      %v332 = vmul.f32 %v328, %v160
      %v333 = vadd.f32 %v317, %v329
      %v334 = vadd.f32 %v318, %v330
      %v335 = vadd.f32 %v319, %v331
      %v336 = vadd.f32 %v320, %v332
      %v337 = vsub.f32 %v17, 1.0
      %v338 = vsub.f32 %v18, 1.0
      %v339 = vsub.f32 %v19, 1.0
      %v340 = vsub.f32 %v20, 1.0
      %v341 = vmul.f32 %v337, 1.5
      %v342 = vmul.f32 %v338, 1.5
      %v343 = vmul.f32 %v339, 1.5
      %v344 = vmul.f32 %v340, 1.5
      %v345 = vmul.f32 %v341, %v157
      %v346 = vmul.f32 %v342, %v158
      %v347 = vmul.f32 %v343, %v159
      %v348 = vmul.f32 %v344, %v160
      %v349 = vsub.f32 2.3333333, %v17
      %v350 = vsub.f32 2.3333333, %v18
      %v351 = vsub.f32 2.3333333, %v19
      %v352 = vsub.f32 2.3333333, %v20
      %v353 = vmul.f32 %v349, 1.5
      %v354 = vmul.f32 %v350, 1.5
      %v355 = vmul.f32 %v351, 1.5
      %v356 = vmul.f32 %v352, 1.5
      %v357 = vmul.f32 %v353, %v161
      %v358 = vmul.f32 %v354, %v162
      %v359 = vmul.f32 %v355, %v163
      %v360 = vmul.f32 %v356, %v164
      %v361 = vadd.f32 %v345, %v357
      %v362 = vadd.f32 %v346, %v358
      %v363 = vadd.f32 %v347, %v359
      %v364 = vadd.f32 %v348, %v360
      %v365 = vsub.f32 %v17, 1.6666666
      %v366 = vsub.f32 %v18, 1.6666666
      %v367 = vsub.f32 %v19, 1.6666666
      %v368 = vsub.f32 %v20, 1.6666666
      %v369 = vmul.f32 %v365, 1.5
      %v370 = vmul.f32 %v366, 1.5
      %v371 = vmul.f32 %v367, 1.5
      %v372 = vmul.f32 %v368, 1.5
      %v373 = vmul.f32 %v369, %v161
      %v374 = vmul.f32 %v370, %v162
      %v375 = vmul.f32 %v371, %v163
      %v376 = vmul.f32 %v372, %v164
      %v377 = vsub.f32 3.0, %v17
      %v378 = vsub.f32 3.0, %v18
      %v379 = vsub.f32 3.0, %v19
      %v380 = vsub.f32 3.0, %v20
      %v381 = vmul.f32 %v377, 1.5
      %v382 = vmul.f32 %v378, 1.5
      %v383 = vmul.f32 %v379, 1.5
      %v384 = vmul.f32 %v380, 1.5
      %v385 = vmul.f32 %v381, %v165
      %v386 = vmul.f32 %v382, %v166
      %v387 = vmul.f32 %v383, %v167
      %v388 = vmul.f32 %v384, %v168
      %v389 = vadd.f32 %v373, %v385
      %v390 = vadd.f32 %v374, %v386
      %v391 = vadd.f32 %v375, %v387
      %v392 = vadd.f32 %v376, %v388
      %v393 = vmul.f32 %v169, 0.75
      %v394 = vmul.f32 %v170, 0.75
      %v395 = vmul.f32 %v171, 0.75
      %v396 = vmul.f32 %v172, 0.75
      %v397 = vmul.f32 %v393, %v193
      %v398 = vmul.f32 %v394, %v194
      %v399 = vmul.f32 %v395, %v195
      %v400 = vmul.f32 %v396, %v196
      %v401 = vmul.f32 %v209, 0.75
      %v402 = vmul.f32 %v210, 0.75
      %v403 = vmul.f32 %v211, 0.75
      %v404 = vmul.f32 %v212, 0.75
      %v405 = vmul.f32 %v401, %v221
      %v406 = vmul.f32 %v402, %v222
      %v407 = vmul.f32 %v403, %v223
      %v408 = vmul.f32 %v404, %v224
      %v409 = vadd.f32 %v397, %v405
      %v410 = vadd.f32 %v398, %v406
      %v411 = vadd.f32 %v399, %v407
      %v412 = vadd.f32 %v400, %v408
      %v413 = vmul.f32 %v197, 0.75
      %v414 = vmul.f32 %v198, 0.75
      %v415 = vmul.f32 %v199, 0.75
      %v416 = vmul.f32 %v200, 0.75
      %v417 = vmul.f32 %v413, %v221
      %v418 = vmul.f32 %v414, %v222
      %v419 = vmul.f32 %v415, %v223
      %v420 = vmul.f32 %v416, %v224
      %v421 = vmul.f32 %v237, 0.75
      %v422 = vmul.f32 %v238, 0.75
      %v423 = vmul.f32 %v239, 0.75
      %v424 = vmul.f32 %v240, 0.75
      %v425 = vmul.f32 %v421, %v249
      %v426 = vmul.f32 %v422, %v250
      %v427 = vmul.f32 %v423, %v251
      %v428 = vmul.f32 %v424, %v252
      %v429 = vadd.f32 %v417, %v425
      %v430 = vadd.f32 %v418, %v426
      %v431 = vadd.f32 %v419, %v427
      %v432 = vadd.f32 %v420, %v428
      %v433 = vmul.f32 %v225, 0.75
      %v434 = vmul.f32 %v226, 0.75
      %v435 = vmul.f32 %v227, 0.75
      %v436 = vmul.f32 %v228, 0.75
      %v437 = vmul.f32 %v433, %v249
      %v438 = vmul.f32 %v434, %v250
      %v439 = vmul.f32 %v435, %v251
      %v440 = vmul.f32 %v436, %v252
      %v441 = vmul.f32 %v265, 0.75
      %v442 = vmul.f32 %v266, 0.75
      %v443 = vmul.f32 %v267, 0.75
      %v444 = vmul.f32 %v268, 0.75
      %v445 = vmul.f32 %v441, %v277
      %v446 = vmul.f32 %v442, %v278
      %v447 = vmul.f32 %v443, %v279
      %v448 = vmul.f32 %v444, %v280
      %v449 = vadd.f32 %v437, %v445
      %v450 = vadd.f32 %v438, %v446
      %v451 = vadd.f32 %v439, %v447
      %v452 = vadd.f32 %v440, %v448
      %v453 = vmul.f32 %v253, 0.75
      %v454 = vmul.f32 %v254, 0.75
      %v455 = vmul.f32 %v255, 0.75
      %v456 = vmul.f32 %v256, 0.75
      %v457 = vmul.f32 %v453, %v277
      %v458 = vmul.f32 %v454, %v278
      %v459 = vmul.f32 %v455, %v279
      %v460 = vmul.f32 %v456, %v280
      %v461 = vmul.f32 %v293, 0.75
      %v462 = vmul.f32 %v294, 0.75
      %v463 = vmul.f32 %v295, 0.75
      %v464 = vmul.f32 %v296, 0.75
      %v465 = vmul.f32 %v461, %v305
      %v466 = vmul.f32 %v462, %v306
      %v467 = vmul.f32 %v463, %v307
      %v468 = vmul.f32 %v464, %v308
      %v469 = vadd.f32 %v457, %v465
      %v470 = vadd.f32 %v458, %v466
      %v471 = vadd.f32 %v459, %v467
      %v472 = vadd.f32 %v460, %v468
      %v473 = vmul.f32 %v281, 0.75
      %v474 = vmul.f32 %v282, 0.75
      %v475 = vmul.f32 %v283, 0.75
      %v476 = vmul.f32 %v284, 0.75
      %v477 = vmul.f32 %v473, %v305
      %v478 = vmul.f32 %v474, %v306
      %v479 = vmul.f32 %v475, %v307
      %v480 = vmul.f32 %v476, %v308
      %v481 = vmul.f32 %v321, 0.75
      %v482 = vmul.f32 %v322, 0.75
      %v483 = vmul.f32 %v323, 0.75
      %v484 = vmul.f32 %v324, 0.75
      %v485 = vmul.f32 %v481, %v333
      %v486 = vmul.f32 %v482, %v334
      %v487 = vmul.f32 %v483, %v335
      %v488 = vmul.f32 %v484, %v336
      %v489 = vadd.f32 %v477, %v485
      %v490 = vadd.f32 %v478, %v486
      %v491 = vadd.f32 %v479, %v487
      %v492 = vadd.f32 %v480, %v488
      %v493 = vmul.f32 %v309, 0.75
      %v494 = vmul.f32 %v310, 0.75
      %v495 = vmul.f32 %v311, 0.75
      %v496 = vmul.f32 %v312, 0.75
      %v497 = vmul.f32 %v493, %v333
      %v498 = vmul.f32 %v494, %v334
      %v499 = vmul.f32 %v495, %v335
      %v500 = vmul.f32 %v496, %v336
      %v501 = vmul.f32 %v349, 0.75
      %v502 = vmul.f32 %v350, 0.75
      %v503 = vmul.f32 %v351, 0.75
      %v504 = vmul.f32 %v352, 0.75
      %v505 = vmul.f32 %v501, %v361
      %v506 = vmul.f32 %v502, %v362
      %v507 = vmul.f32 %v503, %v363
      %v508 = vmul.f32 %v504, %v364
      %v509 = vadd.f32 %v497, %v505
      %v510 = vadd.f32 %v498, %v506
      %v511 = vadd.f32 %v499, %v507
      %v512 = vadd.f32 %v500, %v508
      %v513 = vmul.f32 %v337, 0.75
      %v514 = vmul.f32 %v338, 0.75
      %v515 = vmul.f32 %v339, 0.75
      %v516 = vmul.f32 %v340, 0.75
      %v517 = vmul.f32 %v513, %v361
      %v518 = vmul.f32 %v514, %v362
      %v519 = vmul.f32 %v515, %v363
      %v520 = vmul.f32 %v516, %v364
      %v521 = vmul.f32 %v377, 0.75
      %v522 = vmul.f32 %v378, 0.75
      %v523 = vmul.f32 %v379, 0.75
      %v524 = vmul.f32 %v380, 0.75
      %v525 = vmul.f32 %v521, %v389
      %v526 = vmul.f32 %v522, %v390
      %v527 = vmul.f32 %v523, %v391
      %v528 = vmul.f32 %v524, %v392
      %v529 = vadd.f32 %v517, %v525
      %v530 = vadd.f32 %v518, %v526
      %v531 = vadd.f32 %v519, %v527
      %v532 = vadd.f32 %v520, %v528
      %v533 = vmul.f32 %v169, 0.5
      %v534 = vmul.f32 %v170, 0.5
      %v535 = vmul.f32 %v171, 0.5
      %v536 = vmul.f32 %v172, 0.5
      %v537 = vmul.f32 %v533, %v409
      %v538 = vmul.f32 %v534, %v410
      %v539 = vmul.f32 %v535, %v411
      %v540 = vmul.f32 %v536, %v412
      %v541 = vmul.f32 %v237, 0.5
      %v542 = vmul.f32 %v238, 0.5
      %v543 = vmul.f32 %v239, 0.5
      %v544 = vmul.f32 %v240, 0.5
      %v545 = vmul.f32 %v541, %v429
      %v546 = vmul.f32 %v542, %v430
      %v547 = vmul.f32 %v543, %v431
      %v548 = vmul.f32 %v544, %v432
      %v549 = vadd.f32 %v537, %v545
      %v550 = vadd.f32 %v538, %v546
      %v551 = vadd.f32 %v539, %v547
      %v552 = vadd.f32 %v540, %v548
      %v553 = vmul.f32 %v197, 0.5
      %v554 = vmul.f32 %v198, 0.5
      %v555 = vmul.f32 %v199, 0.5
      %v556 = vmul.f32 %v200, 0.5
      %v557 = vmul.f32 %v553, %v429
      %v558 = vmul.f32 %v554, %v430
      %v559 = vmul.f32 %v555, %v431
      %v560 = vmul.f32 %v556, %v432
      %v561 = vmul.f32 %v265, 0.5
      %v562 = vmul.f32 %v266, 0.5
      %v563 = vmul.f32 %v267, 0.5
      %v564 = vmul.f32 %v268, 0.5
      %v565 = vmul.f32 %v561, %v449
      %v566 = vmul.f32 %v562, %v450
      %v567 = vmul.f32 %v563, %v451
      %v568 = vmul.f32 %v564, %v452
      %v569 = vadd.f32 %v557, %v565
      %v570 = vadd.f32 %v558, %v566
      %v571 = vadd.f32 %v559, %v567
      %v572 = vadd.f32 %v560, %v568
      %v573 = vmul.f32 %v225, 0.5
      %v574 = vmul.f32 %v226, 0.5
      %v575 = vmul.f32 %v227, 0.5
      %v576 = vmul.f32 %v228, 0.5
      %v577 = vmul.f32 %v573, %v449
      %v578 = vmul.f32 %v574, %v450
      %v579 = vmul.f32 %v575, %v451
      %v580 = vmul.f32 %v576, %v452
      %v581 = vmul.f32 %v293, 0.5
      %v582 = vmul.f32 %v294, 0.5
      %v583 = vmul.f32 %v295, 0.5
      %v584 = vmul.f32 %v296, 0.5
      %v585 = vmul.f32 %v581, %v469
      %v586 = vmul.f32 %v582, %v470
      %v587 = vmul.f32 %v583, %v471
      %v588 = vmul.f32 %v584, %v472
      %v589 = vadd.f32 %v577, %v585
      %v590 = vadd.f32 %v578, %v586
      %v591 = vadd.f32 %v579, %v587
      %v592 = vadd.f32 %v580, %v588
      %v593 = vmul.f32 %v253, 0.5
      %v594 = vmul.f32 %v254, 0.5
      %v595 = vmul.f32 %v255, 0.5
      %v596 = vmul.f32 %v256, 0.5
      %v597 = vmul.f32 %v593, %v469
      %v598 = vmul.f32 %v594, %v470
      %v599 = vmul.f32 %v595, %v471
      %v600 = vmul.f32 %v596, %v472
      %v601 = vmul.f32 %v321, 0.5
      %v602 = vmul.f32 %v322, 0.5
      %v603 = vmul.f32 %v323, 0.5
      %v604 = vmul.f32 %v324, 0.5
      %v605 = vmul.f32 %v601, %v489
      %v606 = vmul.f32 %v602, %v490
      %v607 = vmul.f32 %v603, %v491
      %v608 = vmul.f32 %v604, %v492
      %v609 = vadd.f32 %v597, %v605
      %v610 = vadd.f32 %v598, %v606
      %v611 = vadd.f32 %v599, %v607
      %v612 = vadd.f32 %v600, %v608
      %v613 = vmul.f32 %v281, 0.5
      %v614 = vmul.f32 %v282, 0.5
      %v615 = vmul.f32 %v283, 0.5
      %v616 = vmul.f32 %v284, 0.5
      %v617 = vmul.f32 %v613, %v489
      %v618 = vmul.f32 %v614, %v490
      %v619 = vmul.f32 %v615, %v491
      %v620 = vmul.f32 %v616, %v492
      %v621 = vmul.f32 %v349, 0.5
      %v622 = vmul.f32 %v350, 0.5
      %v623 = vmul.f32 %v351, 0.5
      %v624 = vmul.f32 %v352, 0.5
      %v625 = vmul.f32 %v621, %v509
      %v626 = vmul.f32 %v622, %v510
      %v627 = vmul.f32 %v623, %v511
      %v628 = vmul.f32 %v624, %v512
      %v629 = vadd.f32 %v617, %v625
      %v630 = vadd.f32 %v618, %v626
      %v631 = vadd.f32 %v619, %v627
      %v632 = vadd.f32 %v620, %v628
      %v633 = vmul.f32 %v309, 0.5
      %v634 = vmul.f32 %v310, 0.5
      %v635 = vmul.f32 %v311, 0.5
      %v636 = vmul.f32 %v312, 0.5
      %v637 = vmul.f32 %v633, %v509
      %v638 = vmul.f32 %v634, %v510
      %v639 = vmul.f32 %v635, %v511
      %v640 = vmul.f32 %v636, %v512
      %v641 = vmul.f32 %v377, 0.5
      %v642 = vmul.f32 %v378, 0.5
      %v643 = vmul.f32 %v379, 0.5
      %v644 = vmul.f32 %v380, 0.5
      %v645 = vmul.f32 %v641, %v529
      %v646 = vmul.f32 %v642, %v530
      %v647 = vmul.f32 %v643, %v531
      %v648 = vmul.f32 %v644, %v532
      %v649 = vadd.f32 %v637, %v645
      %v650 = vadd.f32 %v638, %v646
      %v651 = vadd.f32 %v639, %v647
      %v652 = vadd.f32 %v640, %v648
      %v653 = vpack.c.bf16 %v550, %v549
      %v654 = vpack.c.bf16 %v552, %v551
      %655 = vst [vmem:[#allocation2 + $0x10] sm:$0xff] %v653
      %656 = vst [vmem:[#allocation2 + $0x18] sm:$0xff] %v654
      %v657 = vpack.c.bf16 %v570, %v569
      %v658 = vpack.c.bf16 %v572, %v571
      %659 = vst [vmem:[#allocation2 + $0x20] sm:$0xff] %v657
      %660 = vst [vmem:[#allocation2 + $0x28] sm:$0xff] %v658
      %v661 = vpack.c.bf16 %v590, %v589
      %v662 = vpack.c.bf16 %v592, %v591
      %663 = vst [vmem:[#allocation2 + $0x30] sm:$0xff] %v661
      %664 = vst [vmem:[#allocation2 + $0x38] sm:$0xff] %v662
      %v665 = vpack.c.bf16 %v610, %v609
      %v666 = vpack.c.bf16 %v612, %v611
      %667 = vst [vmem:[#allocation2 + $0x40] sm:$0xff] %v665
      %668 = vst [vmem:[#allocation2 + $0x48] sm:$0xff] %v666
      %v669 = vpack.c.bf16 %v630, %v629
      %v670 = vpack.c.bf16 %v632, %v631
      %671 = vst [vmem:[#allocation2 + $0x50] sm:$0xff] %v669
      %672 = vst [vmem:[#allocation2 + $0x58] sm:$0xff] %v670
      %v673 = vpack.c.bf16 %v650, %v649
      %v674 = vpack.c.bf16 %v652, %v651
      %675 = vst [vmem:[#allocation2 + $0x60] sm:$0xff] %v673
      %676 = vst [vmem:[#allocation2 + $0x68] sm:$0xff] %v674
    $region13: #{tpu_custom_call.1} parent=1 // pred_fallthru
      _
    %v677 = vld [vmem:[%s1] sm:$0xff]
    %v678 = vld [vmem:[%s1 + $0x8] sm:$0xff]
    %v679 = vld [vmem:[%s1 + $0x10] sm:$0xff]
    %v680 = vld [vmem:[%s1 + $0x18] sm:$0xff]
    %v681 = vld [vmem:[%s1 + $0x20] sm:$0xff]
    %v682 = vld [vmem:[%s1 + $0x28] sm:$0xff]
    %v683 = vld [vmem:[%s1 + $0x30] sm:$0xff]
    %v684 = vld [vmem:[%s1 + $0x38] sm:$0xff]
    %v685 = vld [vmem:[%s1 + $0x40] sm:$0xff]
    %v686 = vld [vmem:[%s1 + $0x48] sm:$0xff]
    %v687 = vld [vmem:[%s1 + $0x50] sm:$0xff]
    %v688 = vld [vmem:[%s1 + $0x58] sm:$0xff]
    %v689 = vld [vmem:[%s1 + $0x60] sm:$0xff]
    %v690 = vld [vmem:[%s1 + $0x68] sm:$0xff]
    %v691 = vld [vmem:[%s1 + $0x70] sm:$0xff]
    %v692 = vld [vmem:[%s1 + $0x78] sm:$0xff]
    %v693 = vld [vmem:[#allocation2] sm:$0xff]
    %v694 = vld [vmem:[#allocation2 + $0x8] sm:$0xff]
    %v695 = vld [vmem:[#allocation2 + $0x10] sm:$0xff]
    %v696 = vld [vmem:[#allocation2 + $0x18] sm:$0xff]
    %v697 = vld [vmem:[#allocation2 + $0x20] sm:$0xff]
    %v698 = vld [vmem:[#allocation2 + $0x28] sm:$0xff]
    %v699 = vld [vmem:[#allocation2 + $0x30] sm:$0xff]
    %v700 = vld [vmem:[#allocation2 + $0x38] sm:$0xff]
    %v701 = vld [vmem:[#allocation2 + $0x40] sm:$0xff]
    %v702 = vld [vmem:[#allocation2 + $0x48] sm:$0xff]
    %v703 = vld [vmem:[#allocation2 + $0x50] sm:$0xff]
    %v704 = vld [vmem:[#allocation2 + $0x58] sm:$0xff]
    %v705 = vld [vmem:[#allocation2 + $0x60] sm:$0xff]
    %v706 = vld [vmem:[#allocation2 + $0x68] sm:$0xff]
    %v723 = vunpack.c.l.b16 %v677
    %v724 = vunpack.c.h.b16 %v677
    %v725 = vunpack.c.l.b16 %v678
    %v726 = vunpack.c.h.b16 %v678
    %v727 = vunpack.c.l.b16 %v679
    %v728 = vunpack.c.h.b16 %v679
    %v729 = vunpack.c.l.b16 %v680
    %v730 = vunpack.c.h.b16 %v680
    %v731 = vunpack.c.l.b16 %v681
    %v732 = vunpack.c.h.b16 %v681
    %v733 = vunpack.c.l.b16 %v682
    %v734 = vunpack.c.h.b16 %v682
    %v735 = vunpack.c.l.b16 %v683
    %v736 = vunpack.c.h.b16 %v683
    %v737 = vunpack.c.l.b16 %v684
    %v738 = vunpack.c.h.b16 %v684
    %v739 = vunpack.c.l.b16 %v685
    %v740 = vunpack.c.h.b16 %v685
    %v741 = vunpack.c.l.b16 %v686
    %v742 = vunpack.c.h.b16 %v686
    %v743 = vunpack.c.l.b16 %v687
    %v744 = vunpack.c.h.b16 %v687
    %v745 = vunpack.c.l.b16 %v688
    %v746 = vunpack.c.h.b16 %v688
    %v747 = vunpack.c.l.b16 %v689
    %v748 = vunpack.c.h.b16 %v689
    %v749 = vunpack.c.l.b16 %v690
    %v750 = vunpack.c.h.b16 %v690
    %v751 = vunpack.c.l.b16 %v691
    %v752 = vunpack.c.h.b16 %v691
    %v753 = vunpack.c.l.b16 %v692
    %v754 = vunpack.c.h.b16 %v692
    %v755 = vpack.c.b16 %v725, %v723
    %v756 = vpack.c.b16 %v726, %v724
    %v757 = vpack.c.b16 %v729, %v727
    %v758 = vpack.c.b16 %v730, %v728
    %v759 = vpack.c.b16 %v733, %v731
    %v760 = vpack.c.b16 %v734, %v732
    %v761 = vpack.c.b16 %v737, %v735
    %v762 = vpack.c.b16 %v738, %v736
    %v763 = vpack.c.b16 %v741, %v739
    %v764 = vpack.c.b16 %v742, %v740
    %v765 = vpack.c.b16 %v745, %v743
    %v766 = vpack.c.b16 %v746, %v744
    %v767 = vpack.c.b16 %v749, %v747
    %v768 = vpack.c.b16 %v750, %v748
    %v769 = vpack.c.b16 %v753, %v751
    %v770 = vpack.c.b16 %v754, %v752
    %vm779 = vcmask 785408
    %v781 = vsel %vm779, %v756, 0
    %v784 = vsel %vm779, %v758, 0
    %v787 = vsel %vm779, %v760, 0
    %v790 = vsel %vm779, %v762, 0
    %v793 = vsel %vm779, %v764, 0
    %v796 = vsel %vm779, %v766, 0
    %v799 = vsel %vm779, %v768, 0
    %v802 = vsel %vm779, %v770, 0
    %804 = vmatprep.subr.bf16.mxu0 0
    %805 = vmatpush1.bf16.msra.mxu0 %v693
    %806 = vmatprep.subr.bf16.mxu0 0
    %807 = vmatpush1.bf16.msra.mxu0 %v694
    %808 = vmatprep.subr.bf16.mxu0 0
    %809 = vmatpush1.bf16.msra.mxu0 %v695
    %810 = vmatprep.subr.bf16.mxu0 0
    %811 = vmatpush1.bf16.msra.mxu0 %v696
    %812 = vmatprep.subr.bf16.mxu0 0
    %813 = vmatpush1.bf16.msra.mxu0 %v697
    %814 = vmatprep.subr.bf16.mxu0 0
    %815 = vmatpush1.bf16.msra.mxu0 %v698
    %816 = vmatprep.subr.bf16.mxu0 0
    %817 = vmatpush1.bf16.msra.mxu0 %v699
    %818 = vmatprep.subr.bf16.mxu0 0
    %819 = vmatpush1.bf16.msra.mxu0 %v700
    %820 = vmatprep.subr.bf16.mxu0 0
    %821 = vmatpush1.bf16.msra.mxu0 %v701
    %822 = vmatprep.subr.bf16.mxu0 0
    %823 = vmatpush1.bf16.msra.mxu0 %v702
    %824 = vmatprep.subr.bf16.mxu0 0
    %825 = vmatpush1.bf16.msra.mxu0 %v703
    %826 = vmatprep.subr.bf16.mxu0 0
    %827 = vmatpush1.bf16.msra.mxu0 %v704
    %828 = vmatprep.subr.bf16.mxu0 0
    %829 = vmatpush1.bf16.msra.mxu0 %v705
    %830 = vmatprep.subr.bf16.mxu0 0
    %831 = vmatpush1.bf16.msra.mxu0 %v706
    %832 = vmatprep.subr.bf16.mxu0 0
    %833 = vmatpush1.bf16.msra.mxu0 0
    %834 = vmatprep.subr.bf16.mxu0 0
    %835 = vmatpush1.bf16.msra.mxu0 0
    %836 = vmatprep.mubr.bf16.mxu0 %v781
    %837 = vmatmul.mubr.bf16.gmra.mrb[0].mxu0 %v755
    %v838 = vpop.f32.mrb[0].mxu0
    %v839 = vadd.f32 0.0, %v838
    %v840 = vpop.f32.mrb[0].mxu0
    %v841 = vpop.f32.mrb[0].mxu0
    %v842 = vadd.f32 0.0, %v841
    %v843 = vpop.f32.mrb[0].mxu0
    %844 = vmatprep.mubr.bf16.mxu0 %v784
    %845 = vmatmul.mubr.bf16.gmra.mrb[0].mxu0 %v757
    %v846 = vpop.f32.mrb[0].mxu0
    %v847 = vadd.f32 0.0, %v846
    %v848 = vpop.f32.mrb[0].mxu0
    %v849 = vpop.f32.mrb[0].mxu0
    %v850 = vadd.f32 0.0, %v849
    %v851 = vpop.f32.mrb[0].mxu0
    %852 = vmatprep.mubr.bf16.mxu0 %v787
    %853 = vmatmul.mubr.bf16.gmra.mrb[0].mxu0 %v759
    %v854 = vpop.f32.mrb[0].mxu0
    %v855 = vadd.f32 0.0, %v854
    %v856 = vpop.f32.mrb[0].mxu0
    %v857 = vpop.f32.mrb[0].mxu0
    %v858 = vadd.f32 0.0, %v857
    %v859 = vpop.f32.mrb[0].mxu0
    %860 = vmatprep.mubr.bf16.mxu0 %v790
    %861 = vmatmul.mubr.bf16.gmra.mrb[0].mxu0 %v761
    %v862 = vpop.f32.mrb[0].mxu0
    %v863 = vadd.f32 0.0, %v862
    %v864 = vpop.f32.mrb[0].mxu0
    %v865 = vpop.f32.mrb[0].mxu0
    %v866 = vadd.f32 0.0, %v865
    %v867 = vpop.f32.mrb[0].mxu0
    %868 = vmatprep.mubr.bf16.mxu0 %v793
    %869 = vmatmul.mubr.bf16.gmra.mrb[0].mxu0 %v763
    %v870 = vpop.f32.mrb[0].mxu0
    %v871 = vadd.f32 0.0, %v870
    %v872 = vpop.f32.mrb[0].mxu0
    %v873 = vpop.f32.mrb[0].mxu0
    %v874 = vadd.f32 0.0, %v873
    %v875 = vpop.f32.mrb[0].mxu0
    %876 = vmatprep.mubr.bf16.mxu0 %v796
    %877 = vmatmul.mubr.bf16.gmra.mrb[0].mxu0 %v765
    %v878 = vpop.f32.mrb[0].mxu0
    %v879 = vadd.f32 0.0, %v878
    %v880 = vpop.f32.mrb[0].mxu0
    %v881 = vpop.f32.mrb[0].mxu0
    %v882 = vadd.f32 0.0, %v881
    %v883 = vpop.f32.mrb[0].mxu0
    %884 = vmatprep.mubr.bf16.mxu0 %v799
    %885 = vmatmul.mubr.bf16.gmra.mrb[0].mxu0 %v767
    %v886 = vpop.f32.mrb[0].mxu0
    %v887 = vadd.f32 0.0, %v886
    %v888 = vpop.f32.mrb[0].mxu0
    %v889 = vpop.f32.mrb[0].mxu0
    %v890 = vadd.f32 0.0, %v889
    %v891 = vpop.f32.mrb[0].mxu0
    %892 = vmatprep.mubr.bf16.mxu0 %v802
    %893 = vmatmul.mubr.bf16.gmra.mrb[0].mxu0 %v769
    %v894 = vpop.f32.mrb[0].mxu0
    %v895 = vadd.f32 0.0, %v894
    %v896 = vpop.f32.mrb[0].mxu0
    %v897 = vpop.f32.mrb[0].mxu0
    %v898 = vadd.f32 0.0, %v897
    %v899 = vpop.f32.mrb[0].mxu0
    %900 = vdwg.mxu0
    %901 = vst [vmem:[#allocation3] sm:$0xff] %v839
    %902 = vst [vmem:[#allocation3 + $0x8] sm:$0xff] %v842
    %903 = vst [vmem:[#allocation3 + $0x10] sm:$0xff] %v847
    %904 = vst [vmem:[#allocation3 + $0x18] sm:$0xff] %v850
    %905 = vst [vmem:[#allocation3 + $0x20] sm:$0xff] %v855
    %906 = vst [vmem:[#allocation3 + $0x28] sm:$0xff] %v858
    %907 = vst [vmem:[#allocation3 + $0x30] sm:$0xff] %v863
    %908 = vst [vmem:[#allocation3 + $0x38] sm:$0xff] %v866
    %909 = vst [vmem:[#allocation3 + $0x40] sm:$0xff] %v871
    %910 = vst [vmem:[#allocation3 + $0x48] sm:$0xff] %v874
    %911 = vst [vmem:[#allocation3 + $0x50] sm:$0xff] %v879
    %912 = vst [vmem:[#allocation3 + $0x58] sm:$0xff] %v882
    %913 = vst [vmem:[#allocation3 + $0x60] sm:$0xff] %v887
    %914 = vst [vmem:[#allocation3 + $0x68] sm:$0xff] %v890
    %915 = vst [vmem:[#allocation3 + $0x70] sm:$0xff] %v895
    %916 = vst [vmem:[#allocation3 + $0x78] sm:$0xff] %v898
    // Predicated region
    $region14: #{tpu_custom_call.1} parent=1 // pred_check
      _
    $region15: #{tpu_custom_call.1} parent=1 // pred_check_branch
      %918 = sbr.rel (0) target = $region17
    $region16: #{tpu_custom_call.1} parent=1 // pred_region
      %s920 = ssub.s32 2048, 2048
      %921 = vsyncadd [#allocation4], %s920
      %s922 = sshll.u32 [#allocation3], 4
      %s923 = int_to_ptr.vmem [resolvable:$true] %s922
      %928 = dma.vmem_to_hbm [thread:$0]  %s923, 2048, %s2, [#allocation4], 128, 128, 8
    $region17: #{tpu_custom_call.1} parent=1 // pred_fallthru
      _
    // Predicated region
    $region18: #{tpu_custom_call.1} parent=1 // pred_check
      _
    $region19: #{tpu_custom_call.1} parent=1 // pred_check_branch
      %930 = sbr.rel (0) target = $region21
    $region20: #{tpu_custom_call.1} parent=1 // pred_region
      %931 = dma.done [#allocation4], 2048
    $region21: #{tpu_custom_call.1} parent=1 // pred_fallthru
      _
    %932 = vsyncpa [#allocation4], 1

</llo_original>
